<compile_context>
chip_gen: v6e
topology: v6e:2x2x1
jax: 0.10.0
libtpu: 0.0.40
codegen_flags: <defaults>
</compile_context>

<pallas_src>
import functools

import jax
import jax.numpy as jnp
from jax.experimental import pallas as pl
from jax.experimental.pallas import tpu as pltpu

NUM_CLASSES = 6
# -log(1e-7): exact upper bound of the per-sample reverse-CE term.
RCE_CLAMP = 16.11809565095832


def _round_up(x: int, m: int) -> int:
    return ((x + m - 1) // m) * m


def _make_sce_kernel(alpha: float, beta: float, n_total: int, n_pad: int,
                     tile_n: int, tiles_per_core: int):
    inv_n = 1.0 / float(n_total)
    need_mask = n_pad > n_total

    def sce_kernel(logits_ref, tgt_ref, out_ref):
        # logits_ref: [C, tile_n] (native dtype)   tgt_ref: [1, tile_n] int32
        # out_ref:    [1, 1, 1] f32 (per-core partial, resident across the inner axis)
        core = pl.program_id(0)
        step = pl.program_id(1)

        @pl.when(step == 0)
        def _():
            out_ref[...] = jnp.zeros_like(out_ref)

        x = logits_ref[...].astype(jnp.float32)              # [C, tile_n]
        t = tgt_ref[...]                                      # [1, tile_n] int32

        # log-sum-exp over the class (sublane) axis -- whole-block ops.
        m = jnp.max(x, axis=0, keepdims=True)                 # [1, tile_n]
        s = jnp.sum(jnp.exp(x - m), axis=0, keepdims=True)    # [1, tile_n]
        lse = m + jnp.log(s)                                  # [1, tile_n]

        # select the target-class logit with an iota compare + masked sum.
        cls = jax.lax.broadcasted_iota(jnp.int32, x.shape, 0)
        tgt_logit = jnp.sum(jnp.where(cls == t, x, 0.0), axis=0, keepdims=True)

        ce_per = lse - tgt_logit                               # -log softmax[target]
        rce_per = jnp.minimum(ce_per, RCE_CLAMP)               # == -log(clamp(p_t,1e-7,1))
        per = alpha * ce_per + beta * rce_per                  # [1, tile_n]

        if need_mask:                                          # trace-time: only if padded
            tile_idx = core * tiles_per_core + step
            col = tile_idx * tile_n + jax.lax.broadcasted_iota(
                jnp.int32, per.shape, 1)
            per = jnp.where(col < n_total, per, 0.0)

        partial = jnp.sum(per, axis=1, keepdims=True)          # [1, 1]
        out_ref[...] += partial.reshape(1, 1, 1)

        @pl.when(step == pl.num_programs(1) - 1)
        def _():
            out_ref[...] *= inv_n

    return sce_kernel


@functools.partial(jax.jit, static_argnames=("alpha", "beta", "reduction", "tile_n"))
def symmetric_cross_entropy(logits, targets, alpha=0.1, beta=1.0,
                            reduction="mean", tile_n=131072):
    """Pallas implementation of SymmetricCrossEntropy.forward (reduction='mean')."""
    assert reduction == "mean"
    n, c = logits.shape
    assert c == NUM_CLASSES

    # Lane-dense tiling of the batch axis; tile_n always a multiple of 128.
    tile_n = max(128, min(int(tile_n), _round_up(n, 128)))
    tile_n = _round_up(tile_n, 128)
    num_tiles = -(-n // tile_n)

    # Split batch tiles across 2 TensorCores (megacore on v7x; sequential elsewhere).
    num_cores = 2 if num_tiles >= 2 else 1
    tiles_per_core = -(-num_tiles // num_cores)
    n_pad = num_cores * tiles_per_core * tile_n

    # Lane-dense layout: [C, N] with batch on the 128-lane axis, padded to the grid.
    logits_t = jnp.transpose(logits, (1, 0))
    logits_t = jnp.pad(logits_t, ((0, 0), (0, n_pad - n)))
    targets_2d = jnp.pad(targets.astype(jnp.int32), (0, n_pad - n)).reshape(1, n_pad)

    itemsize = jnp.dtype(logits.dtype).itemsize
    block_bytes = tile_n * (NUM_CLASSES * itemsize + 4)
    vmem_limit_bytes = min(48 << 20, max(16 << 20, 2 * block_bytes + (2 << 20)))

    tpc = tiles_per_core
    out = pl.pallas_call(
        _make_sce_kernel(float(alpha), float(beta), n, n_pad, tile_n, tpc),
        out_shape=jax.ShapeDtypeStruct((num_cores, 1, 1), jnp.float32),
        grid_spec=pltpu.PrefetchScalarGridSpec(
            num_scalar_prefetch=0,
            grid=(num_cores, tiles_per_core),
            in_specs=[
                pl.BlockSpec((NUM_CLASSES, tile_n), lambda cc, i: (0, cc * tpc + i)),
                pl.BlockSpec((1, tile_n), lambda cc, i: (0, cc * tpc + i)),
            ],
            out_specs=pl.BlockSpec((1, 1, 1), lambda cc, i: (cc, 0, 0)),
        ),
        compiler_params=pltpu.CompilerParams(
            dimension_semantics=("parallel", "arbitrary"),
            vmem_limit_bytes=vmem_limit_bytes),
    )(logits_t, targets_2d)

    # Sum the per-core partial means (each already scaled by 1/N).
    return jnp.sum(out)


def _reference(logits, targets, alpha=0.1, beta=1.0):
    """Plain-JAX reference mirroring the PyTorch forward."""
    logits = logits.astype(jnp.float32)
    onehot = jax.nn.one_hot(targets.astype(jnp.int32), NUM_CLASSES, dtype=jnp.float32)
    log_sm = jax.nn.log_softmax(logits, axis=1)
    ce = jnp.mean(-jnp.sum(onehot * log_sm, axis=1))
    sm = jax.nn.softmax(logits, axis=1)
    rce = jnp.mean(-jnp.sum(onehot * jnp.log(jnp.clip(sm, 1e-7, 1.0)), axis=1))
    return alpha * ce + beta * rce


if __name__ == "__main__":
    key = jax.random.PRNGKey(0)
    k1, k2, k3, k4 = jax.random.split(key, 4)

    # small case (single tile, single core)
    batch = 8
    logits = jax.random.normal(k1, (batch, NUM_CLASSES), dtype=jnp.float32)
    targets = jax.random.randint(k2, (batch,), 0, NUM_CLASSES, dtype=jnp.int32)

    loss = symmetric_cross_entropy(logits, targets, alpha=0.1, beta=1.0)
    loss = jax.block_until_ready(loss)
    ref = _reference(logits, targets, alpha=0.1, beta=1.0)
    assert jnp.allclose(loss, ref, rtol=1e-5, atol=1e-5), (loss, ref)

    # multi-tile case with ragged tail: exercises 2-core grid + accumulator + masking
    batch2 = 500
    logits2 = jax.random.normal(k3, (batch2, NUM_CLASSES), dtype=jnp.float32)
    targets2 = jax.random.randint(k4, (batch2,), 0, NUM_CLASSES, dtype=jnp.int32)
    ref2 = _reference(logits2, targets2, alpha=0.1, beta=1.0)

    loss2 = symmetric_cross_entropy(logits2, targets2, alpha=0.1, beta=1.0, tile_n=128)
    loss2 = jax.block_until_ready(loss2)
    assert jnp.allclose(loss2, ref2, rtol=1e-5, atol=1e-5), (loss2, ref2)

    # same data, default (clamped) tile -> single tile, single core path
    loss2b = symmetric_cross_entropy(logits2, targets2, alpha=0.1, beta=1.0)
    loss2b = jax.block_until_ready(loss2b)
    assert jnp.allclose(loss2b, ref2, rtol=1e-5, atol=1e-5), (loss2b, ref2)

    print("KERNEL_OK")
</pallas_src>

<mosaic_0001>
module attributes {stable_mosaic.version = 11 : i64} {
  func.func @sce_kernel(%arg0: i32, %arg1: i32, %arg2: memref<6x128xf32, #tpu.memory_space<vmem>>, %arg3: memref<1x128xi32, #tpu.memory_space<vmem>>, %arg4: memref<1x1x1xf32, #tpu.memory_space<vmem>>) attributes {dimension_semantics = [#tpu.dimension_semantics<parallel>, #tpu.dimension_semantics<arbitrary>], iteration_bounds = array<i64: 1, 1>, scalar_prefetch = 0 : i64, scratch_operands = 0 : i64, tpu.core_type = #tpu.core_type<tc>, window_params = [{transform_indices = @transform_0, window_bounds = array<i64: 6, 128>}, {transform_indices = @transform_1, window_bounds = array<i64: 1, 128>}, {transform_indices = @transform_2, window_bounds = array<i64: 1, 1, 1>}]} {
    %c0_i32 = arith.constant 0 : i32
    %0 = arith.cmpi eq, %arg1, %c0_i32 : i32
    %1 = arith.extui %0 : i1 to i32
    %c0_i32_0 = arith.constant 0 : i32
    %2 = arith.cmpi ne, %1, %c0_i32_0 : i32
    scf.if %2 {
      %cst_20 = arith.constant 0.000000e+00 : f32
      %48 = vector.broadcast %cst_20 : f32 to vector<1x1x1xf32>
      %c0_21 = arith.constant 0 : index
      %c0_22 = arith.constant 0 : index
      %c0_23 = arith.constant 0 : index
      %49 = vector.load %arg4[%c0_21, %c0_22, %c0_23] : memref<1x1x1xf32, #tpu.memory_space<vmem>>, vector<1x1x1xf32>
      tpu.vector_store %arg4[%c0_21, %c0_22, %c0_23], %48 {strides = array<i32>} : memref<1x1x1xf32, #tpu.memory_space<vmem>>, vector<1x1x1xf32>,
    } else {
    }
    %c0 = arith.constant 0 : index
    %c0_1 = arith.constant 0 : index
    %3 = vector.load %arg2[%c0, %c0_1] : memref<6x128xf32, #tpu.memory_space<vmem>>, vector<6x128xf32>
    %c0_2 = arith.constant 0 : index
    %c0_3 = arith.constant 0 : index
    %4 = vector.load %arg3[%c0_2, %c0_3] : memref<1x128xi32, #tpu.memory_space<vmem>>, vector<1x128xi32>
    %cst = arith.constant dense<0xFF800000> : vector<128xf32>
    %5 = vector.multi_reduction <maximumf>, %3, %cst [0] : vector<6x128xf32> to vector<128xf32>
    %6 = vector.shape_cast %5 : vector<128xf32> to vector<1x128xf32>
    %7 = vector.broadcast %6 : vector<1x128xf32> to vector<6x128xf32>
    %8 = arith.subf %3, %7 : vector<6x128xf32>
    %9 = math.exp %8 : vector<6x128xf32>
    %cst_4 = arith.constant dense<0.000000e+00> : vector<128xf32>
    %10 = vector.multi_reduction <add>, %9, %cst_4 [0] : vector<6x128xf32> to vector<128xf32>
    %11 = vector.shape_cast %10 : vector<128xf32> to vector<1x128xf32>
    %12 = math.log %11 : vector<1x128xf32>
    %13 = arith.addf %6, %12 : vector<1x128xf32>
    %14 = tpu.iota {dimensions = array<i32: 0>} : vector<6x128xi32>
    %15 = vector.broadcast %4 : vector<1x128xi32> to vector<6x128xi32>
    %16 = arith.cmpi eq, %14, %15 : vector<6x128xi32>
    %cst_5 = arith.constant 0.000000e+00 : f32
    %17 = vector.broadcast %cst_5 : f32 to vector<6x128xf32>
    %18 = arith.select %16, %3, %17 : vector<6x128xi1>, vector<6x128xf32>
    %cst_6 = arith.constant dense<0.000000e+00> : vector<128xf32>
    %19 = vector.multi_reduction <add>, %18, %cst_6 [0] : vector<6x128xf32> to vector<128xf32>
    %20 = vector.shape_cast %19 : vector<128xf32> to vector<1x128xf32>
    %21 = arith.subf %13, %20 : vector<1x128xf32>
    %cst_7 = arith.constant 16.1180954 : f32
    %22 = vector.broadcast %cst_7 : f32 to vector<1x128xf32>
    %23 = arith.minimumf %21, %22 : vector<1x128xf32>
    %cst_8 = arith.constant 1.000000e-01 : f32
    %24 = vector.broadcast %cst_8 : f32 to vector<1x128xf32>
    %25 = arith.mulf %24, %21 : vector<1x128xf32>
    %cst_9 = arith.constant 1.000000e+00 : f32
    %26 = vector.broadcast %cst_9 : f32 to vector<1x128xf32>
    %27 = arith.mulf %26, %23 : vector<1x128xf32>
    %28 = arith.addf %25, %27 : vector<1x128xf32>
    %c1_i32 = arith.constant 1 : i32
    %29 = arith.muli %arg0, %c1_i32 : i32
    %30 = arith.addi %29, %arg1 : i32
    %c128_i32 = arith.constant 128 : i32
    %31 = arith.muli %30, %c128_i32 : i32
    %32 = tpu.iota {dimensions = array<i32: 1>} : vector<1x128xi32>
    %33 = vector.broadcast %31 : i32 to vector<1x128xi32>
    %34 = arith.addi %33, %32 : vector<1x128xi32>
    %c8_i32 = arith.constant 8 : i32
    %35 = vector.broadcast %c8_i32 : i32 to vector<1x128xi32>
    %36 = arith.cmpi slt, %34, %35 : vector<1x128xi32>
    %cst_10 = arith.constant 0.000000e+00 : f32
    %37 = vector.broadcast %cst_10 : f32 to vector<1x128xf32>
    %38 = arith.select %36, %28, %37 : vector<1x128xi1>, vector<1x128xf32>
    %cst_11 = arith.constant dense<0.000000e+00> : vector<1xf32>
    %39 = vector.multi_reduction <add>, %38, %cst_11 [1] : vector<1x128xf32> to vector<1xf32>
    %40 = vector.shape_cast %39 : vector<1xf32> to vector<1x1xf32>
    %c0_12 = arith.constant 0 : index
    %c0_13 = arith.constant 0 : index
    %c0_14 = arith.constant 0 : index
    %41 = vector.load %arg4[%c0_12, %c0_13, %c0_14] : memref<1x1x1xf32, #tpu.memory_space<vmem>>, vector<1x1x1xf32>
    %42 = vector.shape_cast %40 : vector<1x1xf32> to vector<1x1x1xf32>
    %43 = arith.addf %41, %42 : vector<1x1x1xf32>
    %c0_15 = arith.constant 0 : index
    %c0_16 = arith.constant 0 : index
    %c0_17 = arith.constant 0 : index
    %44 = vector.load %arg4[%c0_15, %c0_16, %c0_17] : memref<1x1x1xf32, #tpu.memory_space<vmem>>, vector<1x1x1xf32>
    tpu.vector_store %arg4[%c0_15, %c0_16, %c0_17], %43 {strides = array<i32>} : memref<1x1x1xf32, #tpu.memory_space<vmem>>, vector<1x1x1xf32>,
    %c0_i32_18 = arith.constant 0 : i32
    %45 = arith.cmpi eq, %arg1, %c0_i32_18 : i32
    %46 = arith.extui %45 : i1 to i32
    %c0_i32_19 = arith.constant 0 : i32
    %47 = arith.cmpi ne, %46, %c0_i32_19 : i32
    scf.if %47 {
      %c0_20 = arith.constant 0 : index
      %c0_21 = arith.constant 0 : index
      %c0_22 = arith.constant 0 : index
      %48 = vector.load %arg4[%c0_20, %c0_21, %c0_22] : memref<1x1x1xf32, #tpu.memory_space<vmem>>, vector<1x1x1xf32>
      %cst_23 = arith.constant 1.250000e-01 : f32
      %49 = vector.broadcast %cst_23 : f32 to vector<1x1x1xf32>
      %50 = arith.mulf %48, %49 : vector<1x1x1xf32>
      %c0_24 = arith.constant 0 : index
      %c0_25 = arith.constant 0 : index
      %c0_26 = arith.constant 0 : index
      %51 = vector.load %arg4[%c0_24, %c0_25, %c0_26] : memref<1x1x1xf32, #tpu.memory_space<vmem>>, vector<1x1x1xf32>
      tpu.vector_store %arg4[%c0_24, %c0_25, %c0_26], %50 {strides = array<i32>} : memref<1x1x1xf32, #tpu.memory_space<vmem>>, vector<1x1x1xf32>,
    } else {
    }
    return
  }
  func.func @transform_0(%arg0: i32, %arg1: i32) -> (i32, i32) {
    %c1_i32 = arith.constant 1 : i32
    %0 = arith.muli %arg0, %c1_i32 : i32
    %1 = arith.addi %0, %arg1 : i32
    %c0_i32 = arith.constant 0 : i32
    %c0_i32_0 = arith.constant 0 : i32
    return %c0_i32, %1 : i32, i32
  }
  func.func @transform_1(%arg0: i32, %arg1: i32) -> (i32, i32) {
    %c1_i32 = arith.constant 1 : i32
    %0 = arith.muli %arg0, %c1_i32 : i32
    %1 = arith.addi %0, %arg1 : i32
    %c0_i32 = arith.constant 0 : i32
    %c0_i32_0 = arith.constant 0 : i32
    return %c0_i32, %1 : i32, i32
  }
  func.func @transform_2(%arg0: i32, %arg1: i32) -> (i32, i32, i32) {
    %c0_i32 = arith.constant 0 : i32
    %c0_i32_0 = arith.constant 0 : i32
    %c0_i32_1 = arith.constant 0 : i32
    return %arg0, %c0_i32, %c0_i32_0 : i32, i32, i32
  }
}

</mosaic_0001>

<llo_original>
// kernel: symmetric_cross_entropy.1
$region0: #{symmetric_cross_entropy.1}
  #allocation0 [shape = 'u32[]', space=smem, size = 0x4, offset = 0x4, fixed_abs, tag = 'smem constant byte address 0x4 - core index']
  #allocation1 [shape = 'u32[144,128]{1,0:T(1,128)}', space=vmem, size = 0x12000, scoped, tag = 'internal scratch']
  %s0 = inlined_call_operand.vmem [shape: f32[6,128], index: 0, kind: input, shape index: {}]
  %s1 = inlined_call_operand.vmem [shape: s32[1,128], index: 1, kind: input, shape index: {}]
  %s2 = inlined_call_operand.hbm [shape: f32[1,1,1], index: 2, kind: output, shape index: {}]
  %s3 = sld [smem:[#allocation0]]
  $region26: #{symmetric_cross_entropy.1} parent=0
    _
  %s5 = ssub.s32 1, %s3
  %s6 = scalar_select 0, %s5, %s3
  $region1: #{symmetric_cross_entropy.1} parent=0
    #allocation2 [shape = 'u8[512]{0}', space=vmem, size = 0x400, scoped, tag = 'output window, operand 0, single buffered']
    #allocation3 [shape = 's32[1]{0}', space=sflag, size = 0x4, scoped, tag = 'scoped memory for symmetric_cross_entropy.1']
    %7 = vsyncpa [#allocation3], 0
    // Predicated region
    $region2: #{symmetric_cross_entropy.1} parent=1 // pred_check
      _
    $region3: #{symmetric_cross_entropy.1} parent=1 // pred_check_branch
      %9 = sbr.rel (0) target = $region5
    $region4: #{symmetric_cross_entropy.1} parent=1 // pred_region
      %s10 = sadd.s32 0, 0
      %p11 = scmp.lt.s32.totalorder %s10, 0
      %s12 = scalar_select %p11, %s10, 0
      %s13 = smul.addr %s12, 8
      %s14 = scalar_lea.vmem %s0, %s13
      %s15 = sadd.s32 0, 0
    $region5: #{symmetric_cross_entropy.1} parent=1 // pred_fallthru
      _
    // Predicated region
    $region6: #{symmetric_cross_entropy.1} parent=1 // pred_check
      _
    $region7: #{symmetric_cross_entropy.1} parent=1 // pred_check_branch
      %17 = sbr.rel (0) target = $region9
    $region8: #{symmetric_cross_entropy.1} parent=1 // pred_region
      %s18 = sadd.s32 0, 0
      %p19 = scmp.lt.s32.totalorder %s18, 0
      %s20 = scalar_select %p19, %s18, 0
      %s21 = scalar_lea.vmem %s1, %s20
      %s22 = sadd.s32 0, 0
    $region9: #{symmetric_cross_entropy.1} parent=1 // pred_fallthru
      _
    %s23 = sadd.s32 0, 0
    %p24 = scmp.lt.s32.totalorder %s23, 0
    %s25 = scalar_select %p24, %s23, 0
    %s26 = smul.addr %s25, 8
    %s27 = scalar_lea.vmem %s0, %s26
    %s28 = sadd.s32 0, 0
    %p29 = scmp.lt.s32.totalorder %s28, 0
    %s30 = scalar_select %p29, %s28, 0
    %s31 = scalar_lea.vmem %s1, %s30
    %s32 = sadd.s32 0, 0
    %p33 = scmp.lt.s32.totalorder %s32, 0
    %s34 = scalar_select %p33, %s32, 0
    %s35 = smul.addr %s34, 8
    %s36 = scalar_lea.vmem %s0, %s35
    %s37 = sadd.s32 0, 0
    %s38 = sadd.s32 0, 0
    %p39 = scmp.lt.s32.totalorder %s38, 0
    %s40 = scalar_select %p39, %s38, 0
    %s41 = scalar_lea.vmem %s1, %s40
    %s42 = sadd.s32 0, 0
    %p43 = scmp.eq.s32.totalorder 0, 0
    // Predicated region
    $region10: #{symmetric_cross_entropy.1} parent=1 // pred_check
      %p44 = pneg %p43
    $region11: #{symmetric_cross_entropy.1} parent=1 // pred_check_branch
      %46 = sbr.rel (%p44) target = $region13
    $region12: #{symmetric_cross_entropy.1} parent=1 // pred_region
      %vm47 = vcmask 0
      %48 = vst.msk [vmem:[#allocation2] sm:$0x1] %vm47, 0.0
    $region13: #{symmetric_cross_entropy.1} parent=1 // pred_fallthru
      _
    %v49 = vld [vmem:[%s36] sm:$0x3f]
    %v50 = vld [vmem:[%s41] sm:$0x1]
    %vm51 = vcmask 1045504
    %v52 = vsel %vm51, %v49, -inf
    %v53 = vrot.slane %v52, 4
    %v54 = vmax.f32 %v52, %v53
    %v55 = vrot.slane %v54, 2
    %v56 = vmax.f32 %v54, %v55
    %v57 = vrot.slane %v56, 1
    %v58 = vmax.f32 %v56, %v57
    %v59 = vsub.f32 %v49, %v58
    %v60 = vmul.f32 %v59, 1.442695
    %v61 = vpow.pop %v60
    %v62 = vsel %vm51, %v61, 0.0
    %v63 = vrot.slane %v62, 4
    %v64 = vadd.f32 %v62, %v63
    %v65 = vrot.slane %v64, 2
    %v66 = vadd.f32 %v64, %v65
    %v67 = vrot.slane %v66, 1
    %v68 = vadd.f32 %v66, %v67
    %v69 = vlog2.pop %v68
    %v70 = vmul.f32 %v69, 0.6931472
    %v71 = vadd.f32 %v58, %v70
    %v72 = vlaneseq
    %v73 = vshrl.u32 %v72, 7
    %v74 = vlaneseq
    %v75 = vshrl.u32 %v74, 7
    %v76 = vsub.s32 0, %v75
    %v77 = vrot.slane %v50, %v76
    %vm78 = vcmp.eq.s32.totalorder %v73, %v77
    %v79 = vsel %vm78, %v49, 0.0
    %v80 = vsel %vm51, %v79, 0.0
    %v81 = vrot.slane %v80, 4
    %v82 = vadd.f32 %v80, %v81
    %v83 = vrot.slane %v82, 2
    %v84 = vadd.f32 %v82, %v83
    %v85 = vrot.slane %v84, 1
    %v86 = vadd.f32 %v84, %v85
    %v87 = vsub.f32 %v71, %v86
    %v88 = vmin.f32 %v87, 16.118095
    %v89 = vmul.f32 %v87, 0.1
    %v90 = vadd.f32 %v89, %v88
    %s91 = sadd.s32 0, 0
    %s92 = smul.u32 %s91, 128
    %v93 = vlaneseq
    %v94 = vand.u32 %v93, 127
    %v95 = vstv %s92
    %v96 = vadd.s32 %v95, %v94
    %vm97 = vcmp.lt.s32.totalorder %v96, 8
    %v98 = vsel %vm97, %v90, 0.0
    %99 = vadd.xlane.f32.xlu0 %v98
    %v100 = vpop.xlane.xlu0 %99
    %v101 = vld [vmem:[#allocation2] sm:$0x1]
    %v102 = vadd.f32 %v101, %v100
    %vm103 = vcmask 0
    %104 = vst.msk [vmem:[#allocation2] sm:$0x1] %vm103, %v102
    // Predicated region
    $region14: #{symmetric_cross_entropy.1} parent=1 // pred_check
      %p105 = pneg %p43
    $region15: #{symmetric_cross_entropy.1} parent=1 // pred_check_branch
      %107 = sbr.rel (%p105) target = $region17
    $region16: #{symmetric_cross_entropy.1} parent=1 // pred_region
      %v108 = vld [vmem:[#allocation2] sm:$0x1]
      %v109 = vmul.f32 %v108, 0.125
      %110 = vst.msk [vmem:[#allocation2] sm:$0x1] %vm103, %v109
    $region17: #{symmetric_cross_entropy.1} parent=1 // pred_fallthru
      _
    // Predicated region
    $region18: #{symmetric_cross_entropy.1} parent=1 // pred_check
      _
    $region19: #{symmetric_cross_entropy.1} parent=1 // pred_check_branch
      %112 = sbr.rel (0) target = $region21
    $region20: #{symmetric_cross_entropy.1} parent=1 // pred_region
      %s114 = ssub.s32 16, 16
      %115 = vsyncadd [#allocation3], %s114
      %s117 = sshll.u32 [#allocation2], 4
      %s118 = int_to_ptr.vmem [resolvable:$true] %s117
      %120 = dma.vmem_to_hbm [thread:$0]  %s118, 16, %s2, [#allocation3]
    $region21: #{symmetric_cross_entropy.1} parent=1 // pred_fallthru
      _
    // Predicated region
    $region22: #{symmetric_cross_entropy.1} parent=1 // pred_check
      _
    $region23: #{symmetric_cross_entropy.1} parent=1 // pred_check_branch
      %122 = sbr.rel (0) target = $region25
    $region24: #{symmetric_cross_entropy.1} parent=1 // pred_region
      %123 = dma.done [#allocation3], 16
    $region25: #{symmetric_cross_entropy.1} parent=1 // pred_fallthru
      _
    %124 = vsyncpa [#allocation3], 1

</llo_original>
